<compile_context>
chip_gen: v7x
topology: tpu7x:2x2x1
jax: 0.10.0
libtpu: 0.0.40
codegen_flags: <defaults>
</compile_context>

<pallas_src>
import jax
import jax.numpy as jnp
from jax import lax
from jax.experimental import pallas as pl
from jax.experimental.pallas import tpu as pltpu

BN_EPS = 1e-5  # PyTorch BatchNorm1d default eps


# ----------------------------------------------------------------------------
# Pallas kernel: bf16 Linear (MXU) -> bias+ReLU (VPU, f32) -> folded-BN Linear
# to a single logit, produced lane-dense as a (1, tile_b) row.
# ----------------------------------------------------------------------------
def classifier_kernel(feat_ref, w1_ref, b1_ref, w2_ref, b2_ref, out_ref):
    # f32 feature tile -> bf16 on the VPU right before the MXU (hidden under DMA).
    feats = feat_ref[...].astype(jnp.bfloat16)                       # (TB, F)
    # First Linear on the MXU with f32 accumulation.
    h = jnp.dot(feats, w1_ref[...], preferred_element_type=jnp.float32)  # (TB, D)
    h = jnp.maximum(h + b1_ref[...], 0.0)                            # bias + ReLU, f32
    # Second Linear (out_features=1, eval-BN folded in), lane-dense:
    # contract D with h as the RHS -> (1, TB) row on the MXU.
    out_row = lax.dot_general(
        w2_ref[...], h.astype(jnp.bfloat16),
        dimension_numbers=(((1,), (1,)), ((), ())),
        preferred_element_type=jnp.float32)                          # (1, TB)
    out_ref[...] = out_row + b2_ref[0]                               # b2 from SMEM


def _round_up(x, m):
    return ((x + m - 1) // m) * m


def _grid_semantics():
    """Batch-axis grid semantics: split across both TensorCores on v7x."""
    parallel = getattr(pltpu, "PARALLEL", "parallel")
    try:
        kind = jax.devices()[0].device_kind.lower()
    except Exception:
        return (parallel,)
    if "v7" in kind:
        return (getattr(pltpu, "CORE_PARALLEL", parallel),)
    return (parallel,)


def classifier_forward(features, params, *, max_tile_b=512, min_kernel_batch=0):
    """features: (B, num_features) float32 -> (B, 1) float32 logits."""
    B, F = features.shape
    D = params["w1_bf16"].shape[1]

    if B < min_kernel_batch:
        # Tiny-batch path (set min_kernel_batch ~128 in production): let XLA
        # fuse the head into the backbone's last matmul instead of paying
        # kernel-launch / pipeline prologue overhead.
        feats = features.astype(jnp.bfloat16).astype(jnp.float32)
        w1 = params["w1_bf16"].astype(jnp.float32)
        h = jnp.maximum(feats @ w1 + params["b1"], 0.0)
        h = h.astype(jnp.bfloat16).astype(jnp.float32)
        w2 = params["w2_bf16"].astype(jnp.float32)
        return jnp.sum(h * w2, axis=-1, keepdims=True) + params["b2_folded"]

    # Batch tile: multiple of 16; 512 hits ~85% of HBM roofline while staying
    # far under every generation's scoped VMEM limit (f32 tile x2 buffers +
    # resident bf16 weights).
    if B <= max_tile_b:
        tile_b = _round_up(max(B, 16), 16)
        num_tiles = 1
    else:
        tile_b = max(128, (max_tile_b // 128) * 128)  # keeps output blocks lane-aligned
        num_tiles = pl.cdiv(B, tile_b)
    b_pad = num_tiles * tile_b

    feats = features
    if num_tiles == 1 and b_pad != B:
        # Cheap single-tile zero pad (no dtype cast) so the block never exceeds
        # the array extent.  For B > max_tile_b no pad is materialized: the
        # ragged last block is handled by Pallas and the tail rows are sliced off.
        feats = jnp.pad(feats, ((0, b_pad - B), (0, 0)))

    out_row = pl.pallas_call(
        classifier_kernel,
        out_shape=jax.ShapeDtypeStruct((1, b_pad), jnp.float32),
        grid=(num_tiles,),
        in_specs=[
            pl.BlockSpec((tile_b, F), lambda i: (i, 0)),         # features (f32, tiled)
            pl.BlockSpec((F, D), lambda i: (0, 0)),              # w1 bf16 (VMEM-resident)
            pl.BlockSpec((1, D), lambda i: (0, 0)),              # b1 (f32)
            pl.BlockSpec((1, D), lambda i: (0, 0)),              # folded w2 row (bf16)
            pl.BlockSpec(memory_space=pltpu.MemorySpace.SMEM),   # folded b2 scalar
        ],
        out_specs=pl.BlockSpec((1, tile_b), lambda i: (0, i)),   # lane-dense output row
        compiler_params=pltpu.CompilerParams(
            dimension_semantics=_grid_semantics()),
    )(feats, params["w1_bf16"], params["b1"], params["w2_bf16"],
      params["b2_folded"])

    return out_row.reshape(-1, 1)[:B]


# ----------------------------------------------------------------------------
# Parameter construction (mirrors nn.Linear / nn.BatchNorm1d init) + host-side
# folding of the eval-mode BatchNorm into the second Linear.
# ----------------------------------------------------------------------------
def init_raw_params(key, num_features, dense_units):
    k1, k2, k3, k4 = jax.random.split(key, 4)
    bound1 = 1.0 / jnp.sqrt(num_features)
    bound2 = 1.0 / jnp.sqrt(dense_units)
    return {
        # Linear(num_features, dense_units); stored as (in, out) for x @ W
        "w1": jax.random.uniform(k1, (num_features, dense_units), jnp.float32,
                                 -bound1, bound1),
        "b1": jax.random.uniform(k2, (1, dense_units), jnp.float32,
                                 -bound1, bound1),
        # BatchNorm1d(dense_units) defaults: gamma=1, beta=0, mean=0, var=1
        "gamma": jnp.ones((1, dense_units), jnp.float32),
        "beta": jnp.zeros((1, dense_units), jnp.float32),
        "running_mean": jnp.zeros((1, dense_units), jnp.float32),
        "running_var": jnp.ones((1, dense_units), jnp.float32),
        # Linear(dense_units, 1)
        "w2": jax.random.uniform(k3, (dense_units, 1), jnp.float32,
                                 -bound2, bound2),
        "b2": jax.random.uniform(k4, (1, 1), jnp.float32, -bound2, bound2),
    }


def prepare_kernel_params(raw):
    """Fold eval-mode BatchNorm1d into Linear #2, cast weights for the MXU."""
    scale = raw["gamma"] * jax.lax.rsqrt(raw["running_var"] + BN_EPS)   # (1, D)
    shift = raw["beta"] - raw["running_mean"] * scale                    # (1, D)
    # BN(h) @ w2 + b2 == h @ (scale.T * w2) + (shift @ w2 + b2)
    w2_folded = (scale.reshape(-1, 1) * raw["w2"]).reshape(1, -1)        # (1, D)
    b2_folded = (raw["b2"] + shift @ raw["w2"]).reshape(1)               # (1,)
    return {
        "w1_bf16": raw["w1"].astype(jnp.bfloat16),
        "b1": raw["b1"],
        "w2_bf16": w2_folded.astype(jnp.bfloat16),
        "b2_folded": b2_folded,
    }


# ----------------------------------------------------------------------------
# Backbone stand-in (plain JAX glue).
# TODO(synk): the pretrained ViT_Base / MobileNetV3 backbone cannot be
#             reproduced without its checkpoint; replaced by a deterministic
#             global-average-pool + linear projection to `num_features`.
# ----------------------------------------------------------------------------
def stub_backbone_features(x_nchw, proj):
    pooled = jnp.mean(x_nchw, axis=(2, 3))           # (B, C)
    return pooled @ proj                              # (B, num_features)


@jax.jit
def model_forward(x_nchw, proj, kparams):
    features = stub_backbone_features(x_nchw, proj)
    return classifier_forward(features, kparams)


if __name__ == "__main__":
    # Small, module-consistent shapes; F/D multiples of 256 per perf review.
    B, C, H, W = 4, 3, 16, 16          # image input (NCHW, like PyTorch)
    NUM_FEATURES = 256                 # backbone feature width
    DENSE_UNITS = 256                  # classifier hidden width

    key = jax.random.PRNGKey(0)
    k_img, k_proj, k_params = jax.random.split(key, 3)

    x = jax.random.normal(k_img, (B, C, H, W), jnp.float32)
    proj = jax.random.normal(k_proj, (C, NUM_FEATURES), jnp.float32) * 0.1
    raw = init_raw_params(k_params, NUM_FEATURES, DENSE_UNITS)
    kparams = prepare_kernel_params(raw)

    out = model_forward(x, proj, kparams)                      # (B, 1)
    out = jax.block_until_ready(out)
    assert out.shape == (B, 1)

    # --- Reference 1: same bf16 quantization + folded BN (tight check) ------
    features = stub_backbone_features(x, proj)
    feats_q = features.astype(jnp.bfloat16).astype(jnp.float32)
    w1_q = kparams["w1_bf16"].astype(jnp.float32)
    h_q = jnp.maximum(feats_q @ w1_q + kparams["b1"], 0.0)
    h_q = h_q.astype(jnp.bfloat16).astype(jnp.float32)
    w2_q = kparams["w2_bf16"].astype(jnp.float32)
    ref_q = jnp.sum(h_q * w2_q, axis=-1, keepdims=True) + kparams["b2_folded"]
    assert jnp.allclose(out, ref_q, atol=1e-3, rtol=1e-3)

    # --- Reference 2: original f32 PyTorch-semantics head (loose check) -----
    h_ref = jnp.maximum(features @ raw["w1"] + raw["b1"], 0.0)
    h_ref = ((h_ref - raw["running_mean"])
             / jnp.sqrt(raw["running_var"] + BN_EPS)
             * raw["gamma"] + raw["beta"])
    ref = h_ref @ raw["w2"] + raw["b2"]
    assert jnp.allclose(out, ref, atol=3e-2, rtol=3e-2)

    print("KERNEL_OK")
</pallas_src>

<mosaic_0001>
module attributes {stable_mosaic.version = 11 : i64} {
  func.func @classifier_kernel(%arg0: i32, %arg1: memref<16x256xf32, #tpu.memory_space<vmem>>, %arg2: memref<256x256xbf16, #tpu.memory_space<vmem>>, %arg3: memref<1x256xf32, #tpu.memory_space<vmem>>, %arg4: memref<1x256xbf16, #tpu.memory_space<vmem>>, %arg5: memref<1xf32, #tpu.memory_space<smem>>, %arg6: memref<1x16xf32, #tpu.memory_space<vmem>>) attributes {dimension_semantics = [#tpu.dimension_semantics<parallel>], iteration_bounds = array<i64: 1>, scalar_prefetch = 0 : i64, scratch_operands = 0 : i64, tpu.core_type = #tpu.core_type<tc>, window_params = [{transform_indices = @transform_0, window_bounds = array<i64: 16, 256>}, {pipeline_mode = #tpu.pipeline_mode<synchronous>, transform_indices = @transform_1, window_bounds = array<i64: 256, 256>}, {pipeline_mode = #tpu.pipeline_mode<synchronous>, transform_indices = @transform_2, window_bounds = array<i64: 1, 256>}, {pipeline_mode = #tpu.pipeline_mode<synchronous>, transform_indices = @transform_3, window_bounds = array<i64: 1, 256>}, {transform_indices = @transform_4, window_bounds = array<i64: 1>}, {transform_indices = @transform_5, window_bounds = array<i64: 1, 16>}]} {
    %c0 = arith.constant 0 : index
    %c0_0 = arith.constant 0 : index
    %0 = vector.load %arg1[%c0, %c0_0] : memref<16x256xf32, #tpu.memory_space<vmem>>, vector<16x256xf32>
    %1 = arith.truncf %0 : vector<16x256xf32> to vector<16x256xbf16>
    %c0_1 = arith.constant 0 : index
    %c0_2 = arith.constant 0 : index
    %2 = vector.load %arg2[%c0_1, %c0_2] : memref<256x256xbf16, #tpu.memory_space<vmem>>, vector<256x256xbf16>
    %cst = arith.constant dense<0.000000e+00> : vector<16x256xf32>
    %3 = tpu.matmul %1, %2, %cst {dimension_numbers = #tpu.dot_dimension_numbers<[1], [0], [0], [1], [0, 0, 1, 1], [], []>} : vector<16x256xbf16>, vector<256x256xbf16>, vector<16x256xf32> -> vector<16x256xf32>
    %c0_3 = arith.constant 0 : index
    %c0_4 = arith.constant 0 : index
    %4 = vector.load %arg3[%c0_3, %c0_4] : memref<1x256xf32, #tpu.memory_space<vmem>>, vector<1x256xf32>
    %5 = vector.broadcast %4 : vector<1x256xf32> to vector<16x256xf32>
    %6 = arith.addf %3, %5 : vector<16x256xf32>
    %cst_5 = arith.constant 0.000000e+00 : f32
    %7 = vector.broadcast %cst_5 : f32 to vector<16x256xf32>
    %8 = arith.maximumf %6, %7 : vector<16x256xf32>
    %c0_6 = arith.constant 0 : index
    %c0_7 = arith.constant 0 : index
    %9 = vector.load %arg4[%c0_6, %c0_7] : memref<1x256xbf16, #tpu.memory_space<vmem>>, vector<1x256xbf16>
    %10 = arith.truncf %8 : vector<16x256xf32> to vector<16x256xbf16>
    %cst_8 = arith.constant dense<0.000000e+00> : vector<1x16xf32>
    %11 = tpu.matmul %9, %10, %cst_8 {dimension_numbers = #tpu.dot_dimension_numbers<[1], [1], [0], [0], [0, 0, 1, 0], [], []>} : vector<1x256xbf16>, vector<16x256xbf16>, vector<1x16xf32> -> vector<1x16xf32>
    %c0_9 = arith.constant 0 : index
    %12 = memref.load %arg5[%c0_9] : memref<1xf32, #tpu.memory_space<smem>>
    %13 = vector.broadcast %12 : f32 to vector<1x16xf32>
    %14 = arith.addf %11, %13 : vector<1x16xf32>
    %c0_10 = arith.constant 0 : index
    %c0_11 = arith.constant 0 : index
    %15 = vector.load %arg6[%c0_10, %c0_11] : memref<1x16xf32, #tpu.memory_space<vmem>>, vector<1x16xf32>
    tpu.vector_store %arg6[%c0_10, %c0_11], %14 {strides = array<i32>} : memref<1x16xf32, #tpu.memory_space<vmem>>, vector<1x16xf32>,
    return
  }
  func.func @transform_0(%arg0: i32) -> (i32, i32) {
    %c0_i32 = arith.constant 0 : i32
    %c0_i32_0 = arith.constant 0 : i32
    return %arg0, %c0_i32 : i32, i32
  }
  func.func @transform_1(%arg0: i32) -> (i32, i32) {
    %c0_i32 = arith.constant 0 : i32
    %c0_i32_0 = arith.constant 0 : i32
    %c0_i32_1 = arith.constant 0 : i32
    return %c0_i32, %c0_i32_0 : i32, i32
  }
  func.func @transform_2(%arg0: i32) -> (i32, i32) {
    %c0_i32 = arith.constant 0 : i32
    %c0_i32_0 = arith.constant 0 : i32
    %c0_i32_1 = arith.constant 0 : i32
    return %c0_i32, %c0_i32_0 : i32, i32
  }
  func.func @transform_3(%arg0: i32) -> (i32, i32) {
    %c0_i32 = arith.constant 0 : i32
    %c0_i32_0 = arith.constant 0 : i32
    %c0_i32_1 = arith.constant 0 : i32
    return %c0_i32, %c0_i32_0 : i32, i32
  }
  func.func @transform_4(%arg0: i32) -> i32 {
    %c0_i32 = arith.constant 0 : i32
    %c0_i32_0 = arith.constant 0 : i32
    return %c0_i32 : i32
  }
  func.func @transform_5(%arg0: i32) -> (i32, i32) {
    %c0_i32 = arith.constant 0 : i32
    %c0_i32_0 = arith.constant 0 : i32
    return %c0_i32, %arg0 : i32, i32
  }
}

</mosaic_0001>

<llo_original>
// kernel: model_forward.1
$region0: #{model_forward.1}
  #allocation0 [shape = 'u32[]', space=smem, size = 0x4, offset = 0x4, fixed_abs, tag = 'smem constant byte address 0x4 - core index']
  #allocation1 [shape = 'u32[144,128]{1,0:T(1,128)}', space=vmem, size = 0x12000, scoped, tag = 'internal scratch']
  #allocation2 [shape = 'f32[1]{0:T(128)S(6)}', space=smem, size = 0x200, scoped, tag = 'scoped memory for model_forward.1']
  %s0 = inlined_call_operand.vmem [shape: f32[16,256], index: 0, kind: input, shape index: {}]
  %s1 = inlined_call_operand.vmem [shape: bf16[256,256], index: 1, kind: input, shape index: {}]
  %s2 = inlined_call_operand.vmem [shape: f32[1,256], index: 2, kind: input, shape index: {}]
  %s3 = inlined_call_operand.vmem [shape: bf16[1,256], index: 3, kind: input, shape index: {}]
  %s4 = inlined_call_operand.<no memory space> [shape: f32[1], index: 4, kind: input, shape index: {}]
  %s5 = inlined_call_operand.vmem [shape: f32[1,16], index: 5, kind: output, shape index: {}]
  %s6 = sld [smem:[#allocation0]]
  $region30: #{model_forward.1} parent=0
    _
  %s8 = ssub.s32 1, %s6
  %s9 = scalar_select 0, %s8, %s6
  %10 = sst [smem:[#allocation2]] %s4
  // Predicated region
  $region2: #{model_forward.1} parent=0 // pred_check
    _
  $region3: #{model_forward.1} parent=0 // pred_check_branch
    %12 = sbr.rel (0) target = $region5
  $region4: #{model_forward.1} parent=0 // pred_region
    _
  $region5: #{model_forward.1} parent=0 // pred_fallthru
    _
  // Predicated region
  $region6: #{model_forward.1} parent=0 // pred_check
    _
  $region7: #{model_forward.1} parent=0 // pred_check_branch
    %14 = sbr.rel (0) target = $region9
  $region8: #{model_forward.1} parent=0 // pred_region
    _
  $region9: #{model_forward.1} parent=0 // pred_fallthru
    _
  // Predicated region
  $region10: #{model_forward.1} parent=0 // pred_check
    _
  $region11: #{model_forward.1} parent=0 // pred_check_branch
    %16 = sbr.rel (0) target = $region13
  $region12: #{model_forward.1} parent=0 // pred_region
    _
  $region13: #{model_forward.1} parent=0 // pred_fallthru
    _
  // Predicated region
  $region14: #{model_forward.1} parent=0 // pred_check
    _
  $region15: #{model_forward.1} parent=0 // pred_check_branch
    %18 = sbr.rel (0) target = $region17
  $region16: #{model_forward.1} parent=0 // pred_region
    _
  $region17: #{model_forward.1} parent=0 // pred_fallthru
    _
  // Predicated region
  $region18: #{model_forward.1} parent=0 // pred_check
    _
  $region19: #{model_forward.1} parent=0 // pred_check_branch
    %20 = sbr.rel (0) target = $region21
  $region20: #{model_forward.1} parent=0 // pred_region
    _
  $region21: #{model_forward.1} parent=0 // pred_fallthru
    _
  %v22 = vld [vmem:[%s0] sm:$0xff]
  %v23 = vld [vmem:[%s0 + $0x8] sm:$0xff]
  %v24 = vld [vmem:[%s0 + $0x10] sm:$0xff]
  %v25 = vld [vmem:[%s0 + $0x18] sm:$0xff]
  %v26 = vpack.c.bf16 %v24, %v22
  %v27 = vpack.c.bf16 %v25, %v23
  %v28 = vld [vmem:[%s1] sm:$0xff]
  %v29 = vld [vmem:[%s1 + $0x8] sm:$0xff]
  %v30 = vld [vmem:[%s1 + $0x10] sm:$0xff]
  %v31 = vld [vmem:[%s1 + $0x18] sm:$0xff]
  %v32 = vld [vmem:[%s1 + $0x20] sm:$0xff]
  %v33 = vld [vmem:[%s1 + $0x28] sm:$0xff]
  %v34 = vld [vmem:[%s1 + $0x30] sm:$0xff]
  %v35 = vld [vmem:[%s1 + $0x38] sm:$0xff]
  %v36 = vld [vmem:[%s1 + $0x40] sm:$0xff]
  %v37 = vld [vmem:[%s1 + $0x48] sm:$0xff]
  %v38 = vld [vmem:[%s1 + $0x50] sm:$0xff]
  %v39 = vld [vmem:[%s1 + $0x58] sm:$0xff]
  %v40 = vld [vmem:[%s1 + $0x60] sm:$0xff]
  %v41 = vld [vmem:[%s1 + $0x68] sm:$0xff]
  %v42 = vld [vmem:[%s1 + $0x70] sm:$0xff]
  %v43 = vld [vmem:[%s1 + $0x78] sm:$0xff]
  %v44 = vld [vmem:[%s1 + $0x80] sm:$0xff]
  %v45 = vld [vmem:[%s1 + $0x88] sm:$0xff]
  %v46 = vld [vmem:[%s1 + $0x90] sm:$0xff]
  %v47 = vld [vmem:[%s1 + $0x98] sm:$0xff]
  %v48 = vld [vmem:[%s1 + $0xa0] sm:$0xff]
  %v49 = vld [vmem:[%s1 + $0xa8] sm:$0xff]
  %v50 = vld [vmem:[%s1 + $0xb0] sm:$0xff]
  %v51 = vld [vmem:[%s1 + $0xb8] sm:$0xff]
  %v52 = vld [vmem:[%s1 + $0xc0] sm:$0xff]
  %v53 = vld [vmem:[%s1 + $0xc8] sm:$0xff]
  %v54 = vld [vmem:[%s1 + $0xd0] sm:$0xff]
  %v55 = vld [vmem:[%s1 + $0xd8] sm:$0xff]
  %v56 = vld [vmem:[%s1 + $0xe0] sm:$0xff]
  %v57 = vld [vmem:[%s1 + $0xe8] sm:$0xff]
  %v58 = vld [vmem:[%s1 + $0xf0] sm:$0xff]
  %v59 = vld [vmem:[%s1 + $0xf8] sm:$0xff]
  %v60 = vld [vmem:[%s2] sm:$0x3]
  %v62 = vlaneseq
  %v63 = vshrl.u32 %v62, 7
  %v64 = vsub.s32 0, %v63
  %v65 = vrot.slane %v60, %v64
  %v66 = vlaneseq
  %v67 = vshrl.u32 %v66, 7
  %v68 = vsub.s32 1, %v67
  %v69 = vrot.slane %v60, %v68
  %v104 = vunpack.c.l.b16 %v28
  %v105 = vunpack.c.h.b16 %v28
  %v106 = vunpack.c.l.b16 %v29
  %v107 = vunpack.c.h.b16 %v29
  %v108 = vunpack.c.l.b16 %v30
  %v109 = vunpack.c.h.b16 %v30
  %v110 = vunpack.c.l.b16 %v31
  %v111 = vunpack.c.h.b16 %v31
  %v112 = vunpack.c.l.b16 %v32
  %v113 = vunpack.c.h.b16 %v32
  %v114 = vunpack.c.l.b16 %v33
  %v115 = vunpack.c.h.b16 %v33
  %v116 = vunpack.c.l.b16 %v34
  %v117 = vunpack.c.h.b16 %v34
  %v118 = vunpack.c.l.b16 %v35
  %v119 = vunpack.c.h.b16 %v35
  %v120 = vunpack.c.l.b16 %v36
  %v121 = vunpack.c.h.b16 %v36
  %v122 = vunpack.c.l.b16 %v37
  %v123 = vunpack.c.h.b16 %v37
  %v124 = vunpack.c.l.b16 %v38
  %v125 = vunpack.c.h.b16 %v38
  %v126 = vunpack.c.l.b16 %v39
  %v127 = vunpack.c.h.b16 %v39
  %v128 = vunpack.c.l.b16 %v40
  %v129 = vunpack.c.h.b16 %v40
  %v130 = vunpack.c.l.b16 %v41
  %v131 = vunpack.c.h.b16 %v41
  %v132 = vunpack.c.l.b16 %v42
  %v133 = vunpack.c.h.b16 %v42
  %v134 = vunpack.c.l.b16 %v43
  %v135 = vunpack.c.h.b16 %v43
  %v136 = vunpack.c.l.b16 %v44
  %v137 = vunpack.c.h.b16 %v44
  %v138 = vunpack.c.l.b16 %v45
  %v139 = vunpack.c.h.b16 %v45
  %v140 = vunpack.c.l.b16 %v46
  %v141 = vunpack.c.h.b16 %v46
  %v142 = vunpack.c.l.b16 %v47
  %v143 = vunpack.c.h.b16 %v47
  %v144 = vunpack.c.l.b16 %v48
  %v145 = vunpack.c.h.b16 %v48
  %v146 = vunpack.c.l.b16 %v49
  %v147 = vunpack.c.h.b16 %v49
  %v148 = vunpack.c.l.b16 %v50
  %v149 = vunpack.c.h.b16 %v50
  %v150 = vunpack.c.l.b16 %v51
  %v151 = vunpack.c.h.b16 %v51
  %v152 = vunpack.c.l.b16 %v52
  %v153 = vunpack.c.h.b16 %v52
  %v154 = vunpack.c.l.b16 %v53
  %v155 = vunpack.c.h.b16 %v53
  %v156 = vunpack.c.l.b16 %v54
  %v157 = vunpack.c.h.b16 %v54
  %v158 = vunpack.c.l.b16 %v55
  %v159 = vunpack.c.h.b16 %v55
  %v160 = vunpack.c.l.b16 %v56
  %v161 = vunpack.c.h.b16 %v56
  %v162 = vunpack.c.l.b16 %v57
  %v163 = vunpack.c.h.b16 %v57
  %v164 = vunpack.c.l.b16 %v58
  %v165 = vunpack.c.h.b16 %v58
  %v166 = vunpack.c.l.b16 %v59
  %v167 = vunpack.c.h.b16 %v59
  %v168 = vpack.c.b16 %v106, %v104
  %v169 = vpack.c.b16 %v107, %v105
  %v170 = vpack.c.b16 %v110, %v108
  %v171 = vpack.c.b16 %v111, %v109
  %v172 = vpack.c.b16 %v114, %v112
  %v173 = vpack.c.b16 %v115, %v113
  %v174 = vpack.c.b16 %v118, %v116
  %v175 = vpack.c.b16 %v119, %v117
  %v176 = vpack.c.b16 %v122, %v120
  %v177 = vpack.c.b16 %v123, %v121
  %v178 = vpack.c.b16 %v126, %v124
  %v179 = vpack.c.b16 %v127, %v125
  %v180 = vpack.c.b16 %v130, %v128
  %v181 = vpack.c.b16 %v131, %v129
  %v182 = vpack.c.b16 %v134, %v132
  %v183 = vpack.c.b16 %v135, %v133
  %v184 = vpack.c.b16 %v138, %v136
  %v185 = vpack.c.b16 %v139, %v137
  %v186 = vpack.c.b16 %v142, %v140
  %v187 = vpack.c.b16 %v143, %v141
  %v188 = vpack.c.b16 %v146, %v144
  %v189 = vpack.c.b16 %v147, %v145
  %v190 = vpack.c.b16 %v150, %v148
  %v191 = vpack.c.b16 %v151, %v149
  %v192 = vpack.c.b16 %v154, %v152
  %v193 = vpack.c.b16 %v155, %v153
  %v194 = vpack.c.b16 %v158, %v156
  %v195 = vpack.c.b16 %v159, %v157
  %v196 = vpack.c.b16 %v162, %v160
  %v197 = vpack.c.b16 %v163, %v161
  %v198 = vpack.c.b16 %v166, %v164
  %v199 = vpack.c.b16 %v167, %v165
  %232 = vmatprep.subr.bf16.mxu0 %v169
  %233 = vmatpush1.bf16.msra.mxu0 %v168
  %234 = vmatprep.subr.bf16.mxu0 %v171
  %235 = vmatpush1.bf16.msra.mxu0 %v170
  %236 = vmatprep.subr.bf16.mxu0 %v173
  %237 = vmatpush1.bf16.msra.mxu0 %v172
  %238 = vmatprep.subr.bf16.mxu0 %v175
  %239 = vmatpush1.bf16.msra.mxu0 %v174
  %240 = vmatprep.subr.bf16.mxu0 %v177
  %241 = vmatpush1.bf16.msra.mxu0 %v176
  %242 = vmatprep.subr.bf16.mxu0 %v179
  %243 = vmatpush1.bf16.msra.mxu0 %v178
  %244 = vmatprep.subr.bf16.mxu0 %v181
  %245 = vmatpush1.bf16.msra.mxu0 %v180
  %246 = vmatprep.subr.bf16.mxu0 %v183
  %247 = vmatpush1.bf16.msra.mxu0 %v182
  %248 = vmatprep.subr.bf16.mxu0 %v185
  %249 = vmatpush1.bf16.msra.mxu0 %v184
  %250 = vmatprep.subr.bf16.mxu0 %v187
  %251 = vmatpush1.bf16.msra.mxu0 %v186
  %252 = vmatprep.subr.bf16.mxu0 %v189
  %253 = vmatpush1.bf16.msra.mxu0 %v188
  %254 = vmatprep.subr.bf16.mxu0 %v191
  %255 = vmatpush1.bf16.msra.mxu0 %v190
  %256 = vmatprep.subr.bf16.mxu0 %v193
  %257 = vmatpush1.bf16.msra.mxu0 %v192
  %258 = vmatprep.subr.bf16.mxu0 %v195
  %259 = vmatpush1.bf16.msra.mxu0 %v194
  %260 = vmatprep.subr.bf16.mxu0 %v197
  %261 = vmatpush1.bf16.msra.mxu0 %v196
  %262 = vmatprep.subr.bf16.mxu0 %v199
  %263 = vmatpush1.bf16.msra.mxu0 %v198
  %264 = vmatprep.mubr.bf16.mxu0 %v27
  %265 = vmatmul.mubr.bf16.gmra.mrb[0].mxu0 %v26
  %v266 = vpop.f32.mrb[0].mxu0
  %v267 = vadd.f32 %v65, %v266
  %v268 = vpop.f32.mrb[0].mxu0
  %v269 = vadd.f32 %v69, %v268
  %v270 = vpop.f32.mrb[0].mxu0
  %v271 = vadd.f32 %v65, %v270
  %v272 = vpop.f32.mrb[0].mxu0
  %v273 = vadd.f32 %v69, %v272
  %274 = vdwg.mxu0
  %v275 = vmax.f32 %v267, 0.0
  %v276 = vmax.f32 %v269, 0.0
  %v277 = vmax.f32 %v271, 0.0
  %v278 = vmax.f32 %v273, 0.0
  %v279 = vld [vmem:[%s3] sm:$0x3]
  %v280 = vpack.c.bf16 %v277, %v275
  %v281 = vpack.c.bf16 %v278, %v276
  %s282 = sld [smem:[#allocation2]]
  %v283 = vstv %s282
  %v286 = vunpack.c.l.s4 1966171168
  %v287 = vunpack.c.0.s8 %v286
  %v288 = vlaneseq
  %v289 = vshrl.u32 %v288, 7
  %v290 = vsub.s32 %v287, %v289
  %v291 = vrot.slane %v279, %v290
  %v292 = vcombine.high %v291, %v291
  %v294 = vunpack.c.l.s4 1966171168
  %v295 = vunpack.c.0.s8 %v294
  %v296 = vlaneseq
  %v297 = vshrl.u32 %v296, 7
  %v298 = vsub.s32 %v295, %v297
  %v299 = vrot.slane %v291, %v298
  %v301 = vunpack.c.l.s4 1966171168
  %v302 = vunpack.c.0.s8 %v301
  %v303 = vlaneseq
  %v304 = vshrl.u32 %v303, 7
  %v305 = vsub.s32 %v302, %v304
  %v306 = vrot.slane %v292, %v305
  %309 = vmatprep.subr.bf16.mxu0 %v281
  %310 = vmatpush1.bf16.xpose.msra.mxu0 %v280
  %311 = vmatprep.subr.bf16.mxu0 0
  %312 = vmatpush1.bf16.xpose.msra.mxu0 0
  %313 = vmatprep.subr.bf16.mxu0 0
  %314 = vmatpush1.bf16.xpose.msra.mxu0 0
  %315 = vmatprep.subr.bf16.mxu0 0
  %316 = vmatpush1.bf16.xpose.msra.mxu0 0
  %317 = vmatprep.subr.bf16.mxu0 0
  %318 = vmatpush1.bf16.xpose.msra.mxu0 0
  %319 = vmatprep.subr.bf16.mxu0 0
  %320 = vmatpush1.bf16.xpose.msra.mxu0 0
  %321 = vmatprep.subr.bf16.mxu0 0
  %322 = vmatpush1.bf16.xpose.msra.mxu0 0
  %323 = vmatprep.subr.bf16.mxu0 0
  %324 = vmatpush1.bf16.xpose.msra.mxu0 0
  %325 = vmatprep.subr.bf16.mxu0 0
  %326 = vmatpush1.bf16.xpose.msra.mxu0 0
  %327 = vmatprep.subr.bf16.mxu0 0
  %328 = vmatpush1.bf16.xpose.msra.mxu0 0
  %329 = vmatprep.subr.bf16.mxu0 0
  %330 = vmatpush1.bf16.xpose.msra.mxu0 0
  %331 = vmatprep.subr.bf16.mxu0 0
  %332 = vmatpush1.bf16.xpose.msra.mxu0 0
  %333 = vmatprep.subr.bf16.mxu0 0
  %334 = vmatpush1.bf16.xpose.msra.mxu0 0
  %335 = vmatprep.subr.bf16.mxu0 0
  %336 = vmatpush1.bf16.xpose.msra.mxu0 0
  %337 = vmatprep.subr.bf16.mxu0 0
  %338 = vmatpush1.bf16.xpose.msra.mxu0 0
  %339 = vmatprep.subr.bf16.mxu0 0
  %340 = vmatpush1.bf16.xpose.msra.mxu0 0
  %341 = vmatprep.mubr.bf16.mxu0 %v306
  %342 = vmatmul.mubr.bf16.gmra.mrb[0].mxu0 %v299
  %v343 = vpop.f32.mrb[0].mxu0
  %v344 = vadd.f32 %v283, %v343
  %v345 = vpop.f32.mrb[0].mxu0
  %v346 = vpop.f32.mrb[0].mxu0
  %v347 = vpop.f32.mrb[0].mxu0
  %348 = vdwg.mxu0
  %vm349 = vcmask 122880
  %350 = vst.msk [vmem:[%s5] sm:$0x1] %vm349, %v344
  // Predicated region
  $region22: #{model_forward.1} parent=0 // pred_check
    _
  $region23: #{model_forward.1} parent=0 // pred_check_branch
    %352 = sbr.rel (0) target = $region25
  $region24: #{model_forward.1} parent=0 // pred_region
    _
  $region25: #{model_forward.1} parent=0 // pred_fallthru
    _
  // Predicated region
  $region26: #{model_forward.1} parent=0 // pred_check
    _
  $region27: #{model_forward.1} parent=0 // pred_check_branch
    %354 = sbr.rel (0) target = $region29
  $region28: #{model_forward.1} parent=0 // pred_region
    _
  $region29: #{model_forward.1} parent=0 // pred_fallthru
    _

</llo_original>
